<compile_context>
chip_gen: v7x
topology: tpu7x:2x2x1
jax: 0.10.0
libtpu: 0.0.40
codegen_flags: <defaults>
</compile_context>

<pallas_src>
import functools

import jax
import jax.numpy as jnp
from jax.experimental import pallas as pl
from jax.experimental.pallas import tpu as pltpu


def _round_up(x, m):
    return ((x + m - 1) // m) * m


def _eup_supports_bf16():
    """True on chips with a bf16-capable EUP (v6e / v7x); False on v5e and older."""
    try:
        kind = jax.devices()[0].device_kind.lower()
    except Exception:
        return False
    if "tpu" not in kind:
        return False
    return not any(old in kind for old in ("v2", "v3", "v4", "v5"))


def _cls_head_kernel(cls_ref, pw_ref, pb_ref, cw_ref, cb_ref, out_ref, *, tanh_dtype):
    """Fused pooler(tanh) + classifier for one batch tile.

    cls_ref : [bb, H]  CLS-token activations (MXU dtype, e.g. bf16)
    pw_ref  : [H, H]   pooler weight, pre-transposed (x @ W.T layout)
    pb_ref  : [1, H]   pooler bias (f32)
    cw_ref  : [1, H]   classifier weight, lane-dense (f32)
    cb_ref  : [1]      classifier bias, SMEM scalar (f32)
    out_ref : [1, bb]  logits, lane-dense (f32)
    """
    # BERT pooler: tanh(cls @ W_pool.T + b_pool). MXU matmul, f32 accumulate.
    acc = (
        jnp.dot(cls_ref[...], pw_ref[...], preferred_element_type=jnp.float32)
        + pb_ref[...]
    )  # [bb, H] f32
    # tanh on the EUP; optionally in bf16 (v6e/v7x) to double EUP throughput.
    pooled = jnp.tanh(acc.astype(tanh_dtype)).astype(jnp.float32)  # [bb, H]
    # Dropout is identity at inference time.
    # Classifier Linear(H->1): VPU multiply + lane reduction (avoids an N=1
    # MXU matmul); bias added as an SMEM scalar.
    logits = jnp.sum(pooled * cw_ref[...], axis=-1) + cb_ref[0]  # [bb]
    out_ref[...] = logits[None, :].astype(out_ref.dtype)  # lane-dense store


def code_sim_linear_cls_head(
    last_hidden_state,
    pooler_w,
    pooler_b,
    cls_w,
    cls_b,
    *,
    block_b=512,
    use_bf16_mxu=True,
    tanh_in_bf16=None,
):
    """Wrapper: slices the CLS token, lays out weights, launches the kernel.

    last_hidden_state: [B, S, H] f32 (output of the external BERT encoder)
    pooler_w: [H, H]  (PyTorch nn.Linear layout: [out, in])
    pooler_b: [H]
    cls_w:    [1, H]
    cls_b:    [1]
    returns logits: [B, 1] f32   (matches nn.Linear(H, 1) output)
    """
    B, S, H = last_hidden_state.shape
    mm_dtype = jnp.bfloat16 if use_bf16_mxu else jnp.float32
    if tanh_in_bf16 is None:
        tanh_in_bf16 = use_bf16_mxu and _eup_supports_bf16()
    tanh_dtype = jnp.bfloat16 if tanh_in_bf16 else jnp.float32

    # CLS-pooling: only the CLS token ever enters the kernel.  Slice + dtype
    # cast fuse into a single XLA pass (strided gather -> bf16 write).
    cls_tok = last_hidden_state[:, 0, :].astype(mm_dtype)  # [B, H]

    pw_t = pooler_w.T.astype(mm_dtype)                      # [H(in), H(out)]
    pb = pooler_b.reshape(1, H).astype(jnp.float32)         # [1, H]
    cw = cls_w.reshape(1, H).astype(jnp.float32)            # [1, H] lane-dense
    cb = cls_b.reshape(1).astype(jnp.float32)               # [1]  -> SMEM scalar

    # Batch tiling.  bb must be a multiple of 128 (lane-dense output block) /
    # 8 (input sublanes) unless it covers the full batch.  For B > 128 we make
    # sure there are at least 2 grid tiles so both v7x TensorCores get work.
    if B > 128:
        bb = min(_round_up(block_b, 128), _round_up(pl.cdiv(B, 2), 128))
    else:
        bb = B  # single full-batch tile; all blocks equal the full array dims
    grid = (pl.cdiv(B, bb),)  # partial tail tile handled implicitly by Pallas

    kernel = functools.partial(_cls_head_kernel, tanh_dtype=tanh_dtype)
    out = pl.pallas_call(
        kernel,
        out_shape=jax.ShapeDtypeStruct((1, B), jnp.float32),
        grid=grid,
        in_specs=[
            pl.BlockSpec((bb, H), lambda i: (i, 0)),        # per-tile CLS slab
            pl.BlockSpec((H, H), lambda i: (0, 0)),         # pooler W (resident)
            pl.BlockSpec((1, H), lambda i: (0, 0)),         # pooler b (resident)
            pl.BlockSpec((1, H), lambda i: (0, 0)),         # cls W   (resident)
            pl.BlockSpec(memory_space=pltpu.MemorySpace.SMEM),  # cls b scalar
        ],
        out_specs=pl.BlockSpec((1, bb), lambda i: (0, i)),  # lane-dense logits
        compiler_params=pltpu.CompilerParams(
            dimension_semantics=("parallel",),
            vmem_limit_bytes=48 * 1024 * 1024,
        ),
    )(cls_tok, pw_t, pb, cw, cb)

    # Layout plumbing only: [1, B] -> [B, 1] to match the module output.
    return out.reshape(B, 1)


def _reference(last_hidden_state, pooler_w, pooler_b, cls_w, cls_b):
    cls_tok = last_hidden_state[:, 0, :]
    pooled = jnp.tanh(cls_tok @ pooler_w.T + pooler_b)
    return pooled @ cls_w.T + cls_b


def _make_inputs(key, B, S, H):
    k_hs, k_pw, k_pb, k_cw, k_cb = jax.random.split(key, 5)
    last_hidden_state = jax.random.normal(k_hs, (B, S, H), dtype=jnp.float32)
    pooler_w = jax.random.normal(k_pw, (H, H), dtype=jnp.float32) * 0.05
    pooler_b = jax.random.normal(k_pb, (H,), dtype=jnp.float32) * 0.05
    cls_w = jax.random.normal(k_cw, (1, H), dtype=jnp.float32) * 0.05
    cls_b = jax.random.normal(k_cb, (1,), dtype=jnp.float32) * 0.05
    return last_hidden_state, pooler_w, pooler_b, cls_w, cls_b


if __name__ == "__main__":
    key = jax.random.PRNGKey(0)
    k1, k2 = jax.random.split(key)

    # 1) Small BERT-like shapes: batch=2, seq=8, hidden=32 (single full tile).
    B, S, H = 2, 8, 32
    args = _make_inputs(k1, B, S, H)
    logits = jax.block_until_ready(code_sim_linear_cls_head(*args))
    ref = _reference(*args)
    assert logits.shape == (B, 1), logits.shape
    # bf16 MXU inputs with f32 accumulation (+ possibly bf16 tanh): small atol.
    assert jnp.allclose(logits, ref, atol=3e-2, rtol=0.0), (logits, ref)

    # Exact-ish f32 kernel path (debug path; MXU default precision, so not bit-exact).
    logits_f32 = jax.block_until_ready(
        code_sim_linear_cls_head(*args, use_bf16_mxu=False, tanh_in_bf16=False)
    )
    assert jnp.allclose(logits_f32, ref, atol=5e-3, rtol=0.0), (logits_f32, ref)

    # 2) Multi-tile batch with a partial tail tile (exercises implicit padding
    #    and the >=2-tile megacore split): batch=200, seq=4, hidden=128.
    B2, S2, H2 = 200, 4, 128
    args2 = _make_inputs(k2, B2, S2, H2)
    logits2 = jax.block_until_ready(code_sim_linear_cls_head(*args2))
    ref2 = _reference(*args2)
    assert logits2.shape == (B2, 1), logits2.shape
    assert jnp.allclose(logits2, ref2, atol=3e-2, rtol=0.0), (
        jnp.max(jnp.abs(logits2 - ref2))
    )

    print("KERNEL_OK")
</pallas_src>

<mosaic_0001>
module attributes {stable_mosaic.version = 11 : i64} {
  func.func @_cls_head_kernel(%arg0: i32, %arg1: memref<2x32xbf16, #tpu.memory_space<vmem>>, %arg2: memref<32x32xbf16, #tpu.memory_space<vmem>>, %arg3: memref<1x32xf32, #tpu.memory_space<vmem>>, %arg4: memref<1x32xf32, #tpu.memory_space<vmem>>, %arg5: memref<1xf32, #tpu.memory_space<smem>>, %arg6: memref<1x2xf32, #tpu.memory_space<vmem>>) attributes {dimension_semantics = [#tpu.dimension_semantics<parallel>], iteration_bounds = array<i64: 1>, scalar_prefetch = 0 : i64, scratch_operands = 0 : i64, tpu.core_type = #tpu.core_type<tc>, window_params = [{transform_indices = @transform_0, window_bounds = array<i64: 2, 32>}, {pipeline_mode = #tpu.pipeline_mode<synchronous>, transform_indices = @transform_1, window_bounds = array<i64: 32, 32>}, {pipeline_mode = #tpu.pipeline_mode<synchronous>, transform_indices = @transform_2, window_bounds = array<i64: 1, 32>}, {pipeline_mode = #tpu.pipeline_mode<synchronous>, transform_indices = @transform_3, window_bounds = array<i64: 1, 32>}, {transform_indices = @transform_4, window_bounds = array<i64: 1>}, {transform_indices = @transform_5, window_bounds = array<i64: 1, 2>}]} {
    %c0 = arith.constant 0 : index
    %c0_0 = arith.constant 0 : index
    %0 = vector.load %arg1[%c0, %c0_0] : memref<2x32xbf16, #tpu.memory_space<vmem>>, vector<2x32xbf16>
    %c0_1 = arith.constant 0 : index
    %c0_2 = arith.constant 0 : index
    %1 = vector.load %arg2[%c0_1, %c0_2] : memref<32x32xbf16, #tpu.memory_space<vmem>>, vector<32x32xbf16>
    %cst = arith.constant dense<0.000000e+00> : vector<2x32xf32>
    %2 = tpu.matmul %0, %1, %cst {dimension_numbers = #tpu.dot_dimension_numbers<[1], [0], [0], [1], [0, 0, 1, 1], [], []>} : vector<2x32xbf16>, vector<32x32xbf16>, vector<2x32xf32> -> vector<2x32xf32>
    %c0_3 = arith.constant 0 : index
    %c0_4 = arith.constant 0 : index
    %3 = vector.load %arg3[%c0_3, %c0_4] : memref<1x32xf32, #tpu.memory_space<vmem>>, vector<1x32xf32>
    %4 = vector.broadcast %3 : vector<1x32xf32> to vector<2x32xf32>
    %5 = arith.addf %2, %4 : vector<2x32xf32>
    %6 = math.tanh %5 : vector<2x32xf32>
    %c0_5 = arith.constant 0 : index
    %c0_6 = arith.constant 0 : index
    %7 = vector.load %arg4[%c0_5, %c0_6] : memref<1x32xf32, #tpu.memory_space<vmem>>, vector<1x32xf32>
    %8 = vector.broadcast %7 : vector<1x32xf32> to vector<2x32xf32>
    %9 = arith.mulf %6, %8 : vector<2x32xf32>
    %cst_7 = arith.constant dense<0.000000e+00> : vector<2xf32>
    %10 = vector.multi_reduction <add>, %9, %cst_7 [1] : vector<2x32xf32> to vector<2xf32>
    %c0_8 = arith.constant 0 : index
    %11 = memref.load %arg5[%c0_8] : memref<1xf32, #tpu.memory_space<smem>>
    %12 = vector.broadcast %11 : f32 to vector<2xf32>
    %13 = arith.addf %10, %12 : vector<2xf32>
    %14 = vector.shape_cast %13 : vector<2xf32> to vector<1x2xf32>
    %c0_9 = arith.constant 0 : index
    %c0_10 = arith.constant 0 : index
    %15 = vector.load %arg6[%c0_9, %c0_10] : memref<1x2xf32, #tpu.memory_space<vmem>>, vector<1x2xf32>
    tpu.vector_store %arg6[%c0_9, %c0_10], %14 {strides = array<i32>} : memref<1x2xf32, #tpu.memory_space<vmem>>, vector<1x2xf32>,
    return
  }
  func.func @transform_0(%arg0: i32) -> (i32, i32) {
    %c0_i32 = arith.constant 0 : i32
    %c0_i32_0 = arith.constant 0 : i32
    return %arg0, %c0_i32 : i32, i32
  }
  func.func @transform_1(%arg0: i32) -> (i32, i32) {
    %c0_i32 = arith.constant 0 : i32
    %c0_i32_0 = arith.constant 0 : i32
    %c0_i32_1 = arith.constant 0 : i32
    return %c0_i32, %c0_i32_0 : i32, i32
  }
  func.func @transform_2(%arg0: i32) -> (i32, i32) {
    %c0_i32 = arith.constant 0 : i32
    %c0_i32_0 = arith.constant 0 : i32
    %c0_i32_1 = arith.constant 0 : i32
    return %c0_i32, %c0_i32_0 : i32, i32
  }
  func.func @transform_3(%arg0: i32) -> (i32, i32) {
    %c0_i32 = arith.constant 0 : i32
    %c0_i32_0 = arith.constant 0 : i32
    %c0_i32_1 = arith.constant 0 : i32
    return %c0_i32, %c0_i32_0 : i32, i32
  }
  func.func @transform_4(%arg0: i32) -> i32 {
    %c0_i32 = arith.constant 0 : i32
    %c0_i32_0 = arith.constant 0 : i32
    return %c0_i32 : i32
  }
  func.func @transform_5(%arg0: i32) -> (i32, i32) {
    %c0_i32 = arith.constant 0 : i32
    %c0_i32_0 = arith.constant 0 : i32
    return %c0_i32, %arg0 : i32, i32
  }
}

</mosaic_0001>

<llo_original>
// kernel: tpu_custom_call.1
$region0: #{tpu_custom_call.1}
  #allocation0 [shape = 'u32[]', space=smem, size = 0x4, offset = 0x4, fixed_abs, tag = 'smem constant byte address 0x4 - core index']
  #allocation1 [shape = 'u32[144,128]{1,0:T(1,128)}', space=vmem, size = 0x12000, scoped, tag = 'internal scratch']
  #allocation2 [shape = 'f32[1]{0:T(128)S(6)}', space=smem, size = 0x200, scoped, tag = 'scoped memory for tpu_custom_call.1']
  %s0 = inlined_call_operand.vmem [shape: bf16[2,32], index: 0, kind: input, shape index: {}]
  %s1 = inlined_call_operand.hbm [shape: bf16[32,32], index: 1, kind: input, shape index: {}]
  %s2 = inlined_call_operand.vmem [shape: f32[1,32], index: 2, kind: input, shape index: {}]
  %s3 = inlined_call_operand.vmem [shape: f32[1,32], index: 3, kind: input, shape index: {}]
  %s4 = inlined_call_operand.<no memory space> [shape: f32[1], index: 4, kind: input, shape index: {}]
  %s5 = inlined_call_operand.hbm [shape: f32[1,2], index: 5, kind: output, shape index: {}]
  %s6 = sld [smem:[#allocation0]]
  $region34: #{tpu_custom_call.1} parent=0
    _
  %s8 = ssub.s32 1, %s6
  %s9 = scalar_select 0, %s8, %s6
  %10 = sst [smem:[#allocation2]] %s4
  $region1: #{tpu_custom_call.1} parent=0
    #allocation3 [shape = 'u8[8192]{0}', space=vmem, size = 0x2000, scoped, tag = 'input window, operand 1, single buffered']
    #allocation4 [shape = 's32[1]{0}', space=sflag, size = 0x4, scoped, tag = 'scoped memory for tpu_custom_call.1']
    #allocation5 [shape = 's32[1]{0}', space=sflag, size = 0x4, scoped, tag = 'scoped memory for tpu_custom_call.1']
    #allocation6 [shape = 'u8[512]{0}', space=vmem, size = 0x400, scoped, tag = 'output window, operand 0, single buffered']
    %11 = vsyncpa [#allocation4], 0
    %12 = vsyncpa [#allocation5], 0
    // Predicated region
    $region2: #{tpu_custom_call.1} parent=1 // pred_check
      _
    $region3: #{tpu_custom_call.1} parent=1 // pred_check_branch
      %14 = sbr.rel (0) target = $region5
    $region4: #{tpu_custom_call.1} parent=1 // pred_region
      _
    $region5: #{tpu_custom_call.1} parent=1 // pred_fallthru
      _
    // Predicated region
    $region6: #{tpu_custom_call.1} parent=1 // pred_check
      _
    $region7: #{tpu_custom_call.1} parent=1 // pred_check_branch
      %16 = sbr.rel (0) target = $region9
    $region8: #{tpu_custom_call.1} parent=1 // pred_region
      %s18 = ssub.s32 256, 256
      %19 = vsyncadd [#allocation4], %s18
      %s20 = sshll.u32 [#allocation3], 4
      %s21 = int_to_ptr.vmem [resolvable:$true] %s20
      %26 = dma.hbm_to_vmem [thread:$0]  %s1, 256, %s21, [#allocation4], 64, 64, 4
    $region9: #{tpu_custom_call.1} parent=1 // pred_fallthru
      _
    // Predicated region
    $region10: #{tpu_custom_call.1} parent=1 // pred_check
      _
    $region11: #{tpu_custom_call.1} parent=1 // pred_check_branch
      %28 = sbr.rel (0) target = $region13
    $region12: #{tpu_custom_call.1} parent=1 // pred_region
      _
    $region13: #{tpu_custom_call.1} parent=1 // pred_fallthru
      _
    // Predicated region
    $region14: #{tpu_custom_call.1} parent=1 // pred_check
      _
    $region15: #{tpu_custom_call.1} parent=1 // pred_check_branch
      %30 = sbr.rel (0) target = $region17
    $region16: #{tpu_custom_call.1} parent=1 // pred_region
      _
    $region17: #{tpu_custom_call.1} parent=1 // pred_fallthru
      _
    // Predicated region
    $region18: #{tpu_custom_call.1} parent=1 // pred_check
      _
    $region19: #{tpu_custom_call.1} parent=1 // pred_check_branch
      %32 = sbr.rel (0) target = $region21
    $region20: #{tpu_custom_call.1} parent=1 // pred_region
      _
    $region21: #{tpu_custom_call.1} parent=1 // pred_fallthru
      _
    // Predicated region
    $region22: #{tpu_custom_call.1} parent=1 // pred_check
      _
    $region23: #{tpu_custom_call.1} parent=1 // pred_check_branch
      %34 = sbr.rel (0) target = $region25
    $region24: #{tpu_custom_call.1} parent=1 // pred_region
      %35 = dma.done [#allocation4], 256
    $region25: #{tpu_custom_call.1} parent=1 // pred_fallthru
      _
    %v37 = vld [vmem:[%s0] sm:$0x1]
    %v38 = vld [vmem:[#allocation3] sm:$0xf]
    %v39 = vld [vmem:[#allocation3 + $0x4] sm:$0xf]
    %v40 = vld [vmem:[#allocation3 + $0x8] sm:$0xf]
    %v41 = vld [vmem:[#allocation3 + $0xc] sm:$0xf]
    %v42 = vld [vmem:[%s2] sm:$0x1]
    %v44 = vlaneseq
    %v45 = vshrl.u32 %v44, 7
    %v46 = vsub.s32 0, %v45
    %v47 = vrot.slane %v42, %v46
    %v53 = vunpack.c.l.b16 %v38
    %v54 = vunpack.c.l.b16 %v39
    %v55 = vunpack.c.l.b16 %v40
    %v56 = vunpack.c.l.b16 %v41
    %v57 = vpack.c.b16 %v54, %v53
    %v58 = vpack.c.b16 %v56, %v55
    %vm61 = vcmask 261120
    %v63 = vsel %vm61, %v37, 0
    %65 = vmatprep.subr.bf16.mxu0 0
    %66 = vmatpush1.bf16.msra.mxu0 %v57
    %67 = vmatprep.subr.bf16.mxu0 0
    %68 = vmatpush1.bf16.msra.mxu0 %v58
    %69 = vmatprep.subr.bf16.mxu0 0
    %70 = vmatpush1.bf16.msra.mxu0 0
    %71 = vmatprep.subr.bf16.mxu0 0
    %72 = vmatpush1.bf16.msra.mxu0 0
    %73 = vmatprep.subr.bf16.mxu0 0
    %74 = vmatpush1.bf16.msra.mxu0 0
    %75 = vmatprep.subr.bf16.mxu0 0
    %76 = vmatpush1.bf16.msra.mxu0 0
    %77 = vmatprep.subr.bf16.mxu0 0
    %78 = vmatpush1.bf16.msra.mxu0 0
    %79 = vmatprep.subr.bf16.mxu0 0
    %80 = vmatpush1.bf16.msra.mxu0 0
    %81 = vmatprep.subr.bf16.mxu0 0
    %82 = vmatpush1.bf16.msra.mxu0 0
    %83 = vmatprep.subr.bf16.mxu0 0
    %84 = vmatpush1.bf16.msra.mxu0 0
    %85 = vmatprep.subr.bf16.mxu0 0
    %86 = vmatpush1.bf16.msra.mxu0 0
    %87 = vmatprep.subr.bf16.mxu0 0
    %88 = vmatpush1.bf16.msra.mxu0 0
    %89 = vmatprep.subr.bf16.mxu0 0
    %90 = vmatpush1.bf16.msra.mxu0 0
    %91 = vmatprep.subr.bf16.mxu0 0
    %92 = vmatpush1.bf16.msra.mxu0 0
    %93 = vmatprep.subr.bf16.mxu0 0
    %94 = vmatpush1.bf16.msra.mxu0 0
    %95 = vmatprep.subr.bf16.mxu0 0
    %96 = vmatpush1.bf16.msra.mxu0 0
    %97 = vmatprep.mubr.bf16.mxu0 0
    %98 = vmatmul.mubr.bf16.gmra.mrb[0].mxu0 %v63
    %v99 = vpop.f32.mrb[0].mxu0
    %v100 = vadd.f32 %v47, %v99
    %v101 = vpop.f32.mrb[0].mxu0
    %v102 = vpop.f32.mrb[0].mxu0
    %v103 = vpop.f32.mrb[0].mxu0
    %104 = vdwg.mxu0
    %v105 = vtanh.pop %v100
    %v106 = vld [vmem:[%s3] sm:$0x1]
    %v108 = vlaneseq
    %v109 = vshrl.u32 %v108, 7
    %v110 = vsub.s32 0, %v109
    %v111 = vrot.slane %v106, %v110
    %v113 = vmul.f32 %v105, %v111
    %vm114 = vcmask 254976
    %v115 = vsel %vm114, %v113, 0.0
    %116 = vadd.xlane.f32.xlu0 %v115
    %v117 = vpop.xlane.xlu0 %116
    %s118 = sld [smem:[#allocation2]]
    %v119 = vstv %s118
    %v120 = vadd.f32 %v117, %v119
    %v122 = vlaneseq
    %v123 = vand.u32 %v122, 127
    %v124 = vlaneseq
    %v125 = vshrl.u32 %v124, 7
    %v126 = vsub.s32 %v123, %v125
    %v127 = vrot.slane %v120, %v126
    %vm129 = vcmask 8192
    %130 = vst.msk [vmem:[#allocation6] sm:$0x1] %vm129, %v127
    // Predicated region
    $region26: #{tpu_custom_call.1} parent=1 // pred_check
      _
    $region27: #{tpu_custom_call.1} parent=1 // pred_check_branch
      %132 = sbr.rel (0) target = $region29
    $region28: #{tpu_custom_call.1} parent=1 // pred_region
      %s134 = ssub.s32 16, 16
      %135 = vsyncadd [#allocation5], %s134
      %s137 = sshll.u32 [#allocation6], 4
      %s138 = int_to_ptr.vmem [resolvable:$true] %s137
      %140 = dma.vmem_to_hbm [thread:$0]  %s138, 16, %s5, [#allocation5]
    $region29: #{tpu_custom_call.1} parent=1 // pred_fallthru
      _
    // Predicated region
    $region30: #{tpu_custom_call.1} parent=1 // pred_check
      _
    $region31: #{tpu_custom_call.1} parent=1 // pred_check_branch
      %142 = sbr.rel (0) target = $region33
    $region32: #{tpu_custom_call.1} parent=1 // pred_region
      %143 = dma.done [#allocation5], 16
    $region33: #{tpu_custom_call.1} parent=1 // pred_fallthru
      _
    %144 = vsyncpa [#allocation4], 1
    %145 = vsyncpa [#allocation5], 1

</llo_original>
